<compile_context>
chip_gen: v6e
topology: v6e:2x2x1
jax: 0.10.0
libtpu: 0.0.40
codegen_flags: <defaults>
</compile_context>

<pallas_src>
import jax
import jax.numpy as jnp
from jax.experimental import pallas as pl
from jax.experimental.pallas import tpu as pltpu


def _round_up(x: int, m: int) -> int:
    return ((x + m - 1) // m) * m


def _cdiv(a: int, b: int) -> int:
    return -(-a // b)


def _mlp_tail(h1_preact, w2_ref, b2_ref, w3_ref, b3_ref, o_ref):
    """ReLU -> Linear2 -> ReLU -> Linear3 -> softmax over the padded 128-lane axis."""
    h1 = jnp.maximum(h1_preact, 0.0)                              # f32 elementwise (v5e-safe)
    h2 = jnp.dot(h1.astype(jnp.bfloat16), w2_ref[...],
                 preferred_element_type=jnp.float32) + b2_ref[...]
    h2 = jnp.maximum(h2, 0.0)
    logits = jnp.dot(h2.astype(jnp.bfloat16), w3_ref[...],
                     preferred_element_type=jnp.float32) + b3_ref[...]
    # Pad lanes carry bias -1e30 -> exp underflows to exactly 0, so the denominator only
    # sums the real E lanes (matches torch.nn.Softmax on the unpadded features).
    m = jnp.max(logits, axis=-1, keepdims=True)
    e = jnp.exp(logits - m)
    denom = jnp.sum(e, axis=-1, keepdims=True)
    o_ref[...] = (e / denom).astype(o_ref.dtype)                  # exact divide: rows sum to 1


def _mlp_kernel_folded(x_ref, w1_ref, b1_ref, w2_ref, b2_ref, w3_ref, b3_ref, o_ref):
    # Hash scalar already folded into x's pad column / w1's pad row: one K-aligned MXU pass.
    h1 = jnp.dot(x_ref[...], w1_ref[...], preferred_element_type=jnp.float32) + b1_ref[...]
    _mlp_tail(h1, w2_ref, b2_ref, w3_ref, b3_ref, o_ref)


def _mlp_kernel_rank1(x_ref, h_ref, w1_ref, w1h_ref, b1_ref,
                      w2_ref, b2_ref, w3_ref, b3_ref, o_ref):
    # D is already a multiple of 128: keep x 128-lane dense and fold the hash scalar in as a
    # rank-1 VPU update instead of padding K from D to D+128 on the dominant input stream.
    h1 = jnp.dot(x_ref[...], w1_ref[...], preferred_element_type=jnp.float32)
    h1 = h1 + h_ref[...].astype(jnp.float32) * w1h_ref[...] + b1_ref[...]
    _mlp_tail(h1, w2_ref, b2_ref, w3_ref, b3_ref, o_ref)


def _choose_batch_tiling(B: int, tb: int):
    """Balanced batch tiles: multiple of 16 sublanes (bf16-native), >=2 (even) tiles when B
    is big enough (v7x two-TC split), near-equal tiles so Bp never blows up to ~2x B."""
    n_tiles = max(1, _cdiv(B, tb))
    if B > 16:
        n_tiles = max(n_tiles, 2)       # v7x: give both TensorCores work
    if n_tiles > 2 and n_tiles % 2:
        n_tiles += 1                    # even tile count balances the two TCs
    TB = _round_up(_cdiv(B, n_tiles), 16)
    Bp = _round_up(B, TB)
    return TB, Bp


def hp_embedding_forward(hp_vec, hp_hash, params, *, embedding_size, fold_hash, tb: int = 2048):
    """Fused 3-layer MLP + softmax forward.

    hp_vec:  [B, D]  vectorized hp representation (what `_from_hp_space` would produce).
    hp_hash: [B, 1]  per-sample hash(hp) scalar (normalized).
    params:  padded / bf16 parameter dict built by HyperparamsEmbedding.__init__.
    Returns the softmax embedding [B, embedding_size] in f32.
    """
    B, D = hp_vec.shape
    Dp, _ = params["w1"].shape
    Ep = params["w3"].shape[1]

    TB, Bp = _choose_batch_tiling(B, tb)

    # Dominant input stream: bf16, K padded/aligned to 128 lanes.
    x = hp_vec.astype(jnp.bfloat16)
    if Dp != D:
        x = jnp.pad(x, ((0, 0), (0, Dp - D)))
    if fold_hash:
        # Hash scalar rides in one of x's existing pad columns -> no extra (TB,1) stream.
        x = x.at[:, D].set(hp_hash[:, 0].astype(jnp.bfloat16))
    if Bp != B:
        x = jnp.pad(x, ((0, Bp - B), (0, 0)))

    # Weights/biases: constant block index -> DMA'd once, stay VMEM-resident across the grid.
    resident = lambda a: pl.BlockSpec(a.shape, lambda i: (0,) * a.ndim)
    weight_args = (params["w1"], params["b1"], params["w2"], params["b2"],
                   params["w3"], params["b3"])
    weight_specs = [resident(a) for a in weight_args]

    if fold_hash:
        kernel = _mlp_kernel_folded
        in_specs = [pl.BlockSpec((TB, Dp), lambda i: (i, 0))] + weight_specs
        args = (x,) + weight_args
    else:
        kernel = _mlp_kernel_rank1
        h = hp_hash.astype(jnp.bfloat16)                 # halves the lane-padded hash block
        if Bp != B:
            h = jnp.pad(h, ((0, Bp - B), (0, 0)))
        in_specs = ([pl.BlockSpec((TB, Dp), lambda i: (i, 0)),
                     pl.BlockSpec((TB, 1), lambda i: (i, 0)),
                     resident(params["w1"]), resident(params["w1_hash"])]
                    + weight_specs[1:])                  # b1, w2, b2, w3, b3
        args = (x, h, params["w1"], params["w1_hash"], params["b1"],
                params["w2"], params["b2"], params["w3"], params["b3"])

    out = pl.pallas_call(
        kernel,
        out_shape=jax.ShapeDtypeStruct((Bp, Ep), jnp.bfloat16),   # lane-dense bf16 writeback
        grid=(Bp // TB,),
        in_specs=in_specs,
        out_specs=pl.BlockSpec((TB, Ep), lambda i: (i, 0)),
        compiler_params=pltpu.CompilerParams(
            dimension_semantics=("parallel",)),                   # v7x: tiles across both TCs
    )(*args)

    return out[:B, :embedding_size].astype(jnp.float32)


class HyperparamsEmbedding:
    """JAX/Pallas port of the torch HyperparamsEmbedding module's dense `_net` forward path."""

    def __init__(self, embedding_size: int, intermediate_embedding_size: int = 128, seed: int = 0):
        self.embedding_size = embedding_size
        self.intermediate_embedding_size = max(embedding_size + 32, intermediate_embedding_size)
        # (`sum(a, b) // 2` in the reference is intended as the mean of the two sizes)
        mean_embedding_size = (self.intermediate_embedding_size + embedding_size) // 2
        hidden2 = min(mean_embedding_size, embedding_size * 2)

        d_in = self.intermediate_embedding_size + 1  # hp-repr ++ hash(hp) scalar
        dims = [(d_in, mean_embedding_size),
                (mean_embedding_size, hidden2),
                (hidden2, embedding_size)]

        key = jax.random.PRNGKey(seed)
        raw = {}
        for li, (fin, fout) in enumerate(dims, start=1):
            key, kw, kb = jax.random.split(key, 3)
            bound = 1.0 / float(fin) ** 0.5  # torch.nn.Linear default uniform init
            raw[f"w{li}"] = jax.random.uniform(kw, (fin, fout), jnp.float32, -bound, bound)
            raw[f"b{li}"] = jax.random.uniform(kb, (1, fout), jnp.float32, -bound, bound)
        self.raw_params = raw  # f32, original shapes (weights stored [in, out])

        # ---- Pad / lay out parameters for the kernel --------------------------------
        D = self.intermediate_embedding_size
        Dp = _round_up(D, 128)
        H1, H1p = mean_embedding_size, _round_up(mean_embedding_size, 128)
        H2, H2p = hidden2, _round_up(hidden2, 128)
        E, Ep = embedding_size, _round_up(embedding_size, 128)

        # Hash handling: if D is not lane-aligned, the hash rides in one of x's pad columns
        # (its weight row goes to row D of the padded w1); otherwise it is a rank-1 update.
        self.fold_hash = Dp > D

        w1 = raw["w1"]
        w1p = jnp.zeros((Dp, H1p), jnp.float32).at[:D, :H1].set(w1[:D])
        w1_hash = None
        if self.fold_hash:
            w1p = w1p.at[D, :H1].set(w1[D])
        else:
            w1_hash = jnp.zeros((1, H1p), jnp.float32).at[:, :H1].set(w1[D:D + 1])
        b1 = jnp.zeros((1, H1p), jnp.float32).at[:, :H1].set(raw["b1"])
        w2 = jnp.zeros((H1p, H2p), jnp.float32).at[:H1, :H2].set(raw["w2"])
        b2 = jnp.zeros((1, H2p), jnp.float32).at[:, :H2].set(raw["b2"])
        w3 = jnp.zeros((H2p, Ep), jnp.float32).at[:H2, :E].set(raw["w3"])
        # Lane-dense output: pad bias lanes with -1e30 so softmax zeroes them exactly.
        b3 = jnp.full((1, Ep), -1e30, jnp.float32).at[:, :E].set(raw["b3"])

        self.params = {
            "w1": w1p.astype(jnp.bfloat16),
            "b1": b1,
            "w2": w2.astype(jnp.bfloat16),
            "b2": b2,
            "w3": w3.astype(jnp.bfloat16),
            "b3": b3,
        }
        if not self.fold_hash:
            self.params["w1_hash"] = w1_hash  # f32: rank-1 update runs on the VPU

        self.d_in = d_in

    def __call__(self, hp_vec, hp_hash):
        # hp_vec: [B, intermediate_embedding_size]; hp_hash: [B, 1] (~ normalized hash(hp))
        return hp_embedding_forward(hp_vec, hp_hash, self.params,
                                    embedding_size=self.embedding_size,
                                    fold_hash=self.fold_hash)


def _reference_forward(hp_vec, hp_hash, raw_params):
    """Pure-JAX f32 reference of the original `_net` forward."""
    x = jnp.concatenate([hp_vec, hp_hash], axis=-1).astype(jnp.float32)
    h1 = jnp.maximum(x @ raw_params["w1"] + raw_params["b1"], 0.0)
    h2 = jnp.maximum(h1 @ raw_params["w2"] + raw_params["b2"], 0.0)
    return jax.nn.softmax(h2 @ raw_params["w3"] + raw_params["b3"], axis=-1)


if __name__ == "__main__":
    key = jax.random.PRNGKey(0)
    # Two configs exercise both hash paths:
    #   embedding_size=16  -> D=128 (lane-aligned)  -> rank-1 hash kernel
    #   embedding_size=100 -> D=132 (needs padding) -> hash folded into x's pad column
    for emb_size in (16, 100):
        module = HyperparamsEmbedding(embedding_size=emb_size, intermediate_embedding_size=128)

        B = 2
        key, k_repr, k_hash = jax.random.split(key, 3)
        # Vectorized hyperparameter representation (what _from_hp_space would produce)
        # plus a normalized "hash" scalar per sample (kept O(1) so bf16 streaming is exact enough).
        hp_vec = jax.random.normal(k_repr, (B, module.intermediate_embedding_size), jnp.float32)
        hp_hash = jax.random.uniform(k_hash, (B, 1), jnp.float32)

        out = jax.block_until_ready(module(hp_vec, hp_hash))

        assert out.shape == (B, emb_size)
        # softmax rows sum to ~1 (exact divide in f32; bf16 output quantization only)
        assert bool(jnp.all(jnp.abs(jnp.sum(out, axis=-1) - 1.0) < 1e-2))
        ref = _reference_forward(hp_vec, hp_hash, module.raw_params)
        assert bool(jnp.max(jnp.abs(out - ref)) < 2e-2)

    print("KERNEL_OK")
</pallas_src>

<mosaic_0001>
module attributes {stable_mosaic.version = 11 : i64} {
  func.func @_mlp_kernel_rank1(%arg0: i32, %arg1: memref<16x128xbf16, #tpu.memory_space<vmem>>, %arg2: memref<16x1xbf16, #tpu.memory_space<vmem>>, %arg3: memref<128x128xbf16, #tpu.memory_space<vmem>>, %arg4: memref<1x128xf32, #tpu.memory_space<vmem>>, %arg5: memref<1x128xf32, #tpu.memory_space<vmem>>, %arg6: memref<128x128xbf16, #tpu.memory_space<vmem>>, %arg7: memref<1x128xf32, #tpu.memory_space<vmem>>, %arg8: memref<128x128xbf16, #tpu.memory_space<vmem>>, %arg9: memref<1x128xf32, #tpu.memory_space<vmem>>, %arg10: memref<16x128xbf16, #tpu.memory_space<vmem>>) attributes {dimension_semantics = [#tpu.dimension_semantics<parallel>], iteration_bounds = array<i64: 1>, scalar_prefetch = 0 : i64, scratch_operands = 0 : i64, tpu.core_type = #tpu.core_type<tc>, window_params = [{transform_indices = @transform_0, window_bounds = array<i64: 16, 128>}, {transform_indices = @transform_1, window_bounds = array<i64: 16, 1>}, {pipeline_mode = #tpu.pipeline_mode<synchronous>, transform_indices = @transform_2, window_bounds = array<i64: 128, 128>}, {pipeline_mode = #tpu.pipeline_mode<synchronous>, transform_indices = @transform_3, window_bounds = array<i64: 1, 128>}, {pipeline_mode = #tpu.pipeline_mode<synchronous>, transform_indices = @transform_4, window_bounds = array<i64: 1, 128>}, {pipeline_mode = #tpu.pipeline_mode<synchronous>, transform_indices = @transform_5, window_bounds = array<i64: 128, 128>}, {pipeline_mode = #tpu.pipeline_mode<synchronous>, transform_indices = @transform_6, window_bounds = array<i64: 1, 128>}, {pipeline_mode = #tpu.pipeline_mode<synchronous>, transform_indices = @transform_7, window_bounds = array<i64: 128, 128>}, {pipeline_mode = #tpu.pipeline_mode<synchronous>, transform_indices = @transform_8, window_bounds = array<i64: 1, 128>}, {transform_indices = @transform_9, window_bounds = array<i64: 16, 128>}]} {
    %c0 = arith.constant 0 : index
    %c0_0 = arith.constant 0 : index
    %0 = vector.load %arg1[%c0, %c0_0] : memref<16x128xbf16, #tpu.memory_space<vmem>>, vector<16x128xbf16>
    %c0_1 = arith.constant 0 : index
    %c0_2 = arith.constant 0 : index
    %1 = vector.load %arg3[%c0_1, %c0_2] : memref<128x128xbf16, #tpu.memory_space<vmem>>, vector<128x128xbf16>
    %cst = arith.constant dense<0.000000e+00> : vector<16x128xf32>
    %2 = tpu.matmul %0, %1, %cst {dimension_numbers = #tpu.dot_dimension_numbers<[1], [0], [0], [1], [0, 0, 1, 1], [], []>} : vector<16x128xbf16>, vector<128x128xbf16>, vector<16x128xf32> -> vector<16x128xf32>
    %c0_3 = arith.constant 0 : index
    %c0_4 = arith.constant 0 : index
    %3 = vector.load %arg2[%c0_3, %c0_4] : memref<16x1xbf16, #tpu.memory_space<vmem>>, vector<16x1xbf16>
    %4 = arith.extf %3 : vector<16x1xbf16> to vector<16x1xf32>
    %c0_5 = arith.constant 0 : index
    %c0_6 = arith.constant 0 : index
    %5 = vector.load %arg4[%c0_5, %c0_6] : memref<1x128xf32, #tpu.memory_space<vmem>>, vector<1x128xf32>
    %6 = vector.broadcast %4 : vector<16x1xf32> to vector<16x128xf32>
    %7 = vector.broadcast %5 : vector<1x128xf32> to vector<16x128xf32>
    %8 = arith.mulf %6, %7 : vector<16x128xf32>
    %9 = arith.addf %2, %8 : vector<16x128xf32>
    %c0_7 = arith.constant 0 : index
    %c0_8 = arith.constant 0 : index
    %10 = vector.load %arg5[%c0_7, %c0_8] : memref<1x128xf32, #tpu.memory_space<vmem>>, vector<1x128xf32>
    %11 = vector.broadcast %10 : vector<1x128xf32> to vector<16x128xf32>
    %12 = arith.addf %9, %11 : vector<16x128xf32>
    %cst_9 = arith.constant 0.000000e+00 : f32
    %13 = vector.broadcast %cst_9 : f32 to vector<16x128xf32>
    %14 = arith.maximumf %12, %13 : vector<16x128xf32>
    %15 = arith.truncf %14 : vector<16x128xf32> to vector<16x128xbf16>
    %c0_10 = arith.constant 0 : index
    %c0_11 = arith.constant 0 : index
    %16 = vector.load %arg6[%c0_10, %c0_11] : memref<128x128xbf16, #tpu.memory_space<vmem>>, vector<128x128xbf16>
    %cst_12 = arith.constant dense<0.000000e+00> : vector<16x128xf32>
    %17 = tpu.matmul %15, %16, %cst_12 {dimension_numbers = #tpu.dot_dimension_numbers<[1], [0], [0], [1], [0, 0, 1, 1], [], []>} : vector<16x128xbf16>, vector<128x128xbf16>, vector<16x128xf32> -> vector<16x128xf32>
    %c0_13 = arith.constant 0 : index
    %c0_14 = arith.constant 0 : index
    %18 = vector.load %arg7[%c0_13, %c0_14] : memref<1x128xf32, #tpu.memory_space<vmem>>, vector<1x128xf32>
    %19 = vector.broadcast %18 : vector<1x128xf32> to vector<16x128xf32>
    %20 = arith.addf %17, %19 : vector<16x128xf32>
    %cst_15 = arith.constant 0.000000e+00 : f32
    %21 = vector.broadcast %cst_15 : f32 to vector<16x128xf32>
    %22 = arith.maximumf %20, %21 : vector<16x128xf32>
    %23 = arith.truncf %22 : vector<16x128xf32> to vector<16x128xbf16>
    %c0_16 = arith.constant 0 : index
    %c0_17 = arith.constant 0 : index
    %24 = vector.load %arg8[%c0_16, %c0_17] : memref<128x128xbf16, #tpu.memory_space<vmem>>, vector<128x128xbf16>
    %cst_18 = arith.constant dense<0.000000e+00> : vector<16x128xf32>
    %25 = tpu.matmul %23, %24, %cst_18 {dimension_numbers = #tpu.dot_dimension_numbers<[1], [0], [0], [1], [0, 0, 1, 1], [], []>} : vector<16x128xbf16>, vector<128x128xbf16>, vector<16x128xf32> -> vector<16x128xf32>
    %c0_19 = arith.constant 0 : index
    %c0_20 = arith.constant 0 : index
    %26 = vector.load %arg9[%c0_19, %c0_20] : memref<1x128xf32, #tpu.memory_space<vmem>>, vector<1x128xf32>
    %27 = vector.broadcast %26 : vector<1x128xf32> to vector<16x128xf32>
    %28 = arith.addf %25, %27 : vector<16x128xf32>
    %cst_21 = arith.constant dense<0xFF800000> : vector<16xf32>
    %29 = vector.multi_reduction <maximumf>, %28, %cst_21 [1] : vector<16x128xf32> to vector<16xf32>
    %30 = vector.shape_cast %29 : vector<16xf32> to vector<16x1xf32>
    %31 = vector.broadcast %30 : vector<16x1xf32> to vector<16x128xf32>
    %32 = arith.subf %28, %31 : vector<16x128xf32>
    %33 = math.exp %32 : vector<16x128xf32>
    %cst_22 = arith.constant dense<0.000000e+00> : vector<16xf32>
    %34 = vector.multi_reduction <add>, %33, %cst_22 [1] : vector<16x128xf32> to vector<16xf32>
    %35 = vector.shape_cast %34 : vector<16xf32> to vector<16x1xf32>
    %36 = vector.broadcast %35 : vector<16x1xf32> to vector<16x128xf32>
    %37 = arith.divf %33, %36 : vector<16x128xf32>
    %38 = arith.truncf %37 : vector<16x128xf32> to vector<16x128xbf16>
    %c0_23 = arith.constant 0 : index
    %c0_24 = arith.constant 0 : index
    %39 = vector.load %arg10[%c0_23, %c0_24] : memref<16x128xbf16, #tpu.memory_space<vmem>>, vector<16x128xbf16>
    tpu.vector_store %arg10[%c0_23, %c0_24], %38 {strides = array<i32>} : memref<16x128xbf16, #tpu.memory_space<vmem>>, vector<16x128xbf16>,
    return
  }
  func.func @transform_0(%arg0: i32) -> (i32, i32) {
    %c0_i32 = arith.constant 0 : i32
    %c0_i32_0 = arith.constant 0 : i32
    return %arg0, %c0_i32 : i32, i32
  }
  func.func @transform_1(%arg0: i32) -> (i32, i32) {
    %c0_i32 = arith.constant 0 : i32
    %c0_i32_0 = arith.constant 0 : i32
    return %arg0, %c0_i32 : i32, i32
  }
  func.func @transform_2(%arg0: i32) -> (i32, i32) {
    %c0_i32 = arith.constant 0 : i32
    %c0_i32_0 = arith.constant 0 : i32
    %c0_i32_1 = arith.constant 0 : i32
    return %c0_i32, %c0_i32_0 : i32, i32
  }
  func.func @transform_3(%arg0: i32) -> (i32, i32) {
    %c0_i32 = arith.constant 0 : i32
    %c0_i32_0 = arith.constant 0 : i32
    %c0_i32_1 = arith.constant 0 : i32
    return %c0_i32, %c0_i32_0 : i32, i32
  }
  func.func @transform_4(%arg0: i32) -> (i32, i32) {
    %c0_i32 = arith.constant 0 : i32
    %c0_i32_0 = arith.constant 0 : i32
    %c0_i32_1 = arith.constant 0 : i32
    return %c0_i32, %c0_i32_0 : i32, i32
  }
  func.func @transform_5(%arg0: i32) -> (i32, i32) {
    %c0_i32 = arith.constant 0 : i32
    %c0_i32_0 = arith.constant 0 : i32
    %c0_i32_1 = arith.constant 0 : i32
    return %c0_i32, %c0_i32_0 : i32, i32
  }
  func.func @transform_6(%arg0: i32) -> (i32, i32) {
    %c0_i32 = arith.constant 0 : i32
    %c0_i32_0 = arith.constant 0 : i32
    %c0_i32_1 = arith.constant 0 : i32
    return %c0_i32, %c0_i32_0 : i32, i32
  }
  func.func @transform_7(%arg0: i32) -> (i32, i32) {
    %c0_i32 = arith.constant 0 : i32
    %c0_i32_0 = arith.constant 0 : i32
    %c0_i32_1 = arith.constant 0 : i32
    return %c0_i32, %c0_i32_0 : i32, i32
  }
  func.func @transform_8(%arg0: i32) -> (i32, i32) {
    %c0_i32 = arith.constant 0 : i32
    %c0_i32_0 = arith.constant 0 : i32
    %c0_i32_1 = arith.constant 0 : i32
    return %c0_i32, %c0_i32_0 : i32, i32
  }
  func.func @transform_9(%arg0: i32) -> (i32, i32) {
    %c0_i32 = arith.constant 0 : i32
    %c0_i32_0 = arith.constant 0 : i32
    return %arg0, %c0_i32 : i32, i32
  }
}

</mosaic_0001>

<llo_original>
// kernel: tpu_custom_call.1
$region0: #{tpu_custom_call.1}
  #allocation0 [shape = 'u32[]', space=smem, size = 0x4, offset = 0x4, fixed_abs, tag = 'smem constant byte address 0x4 - core index']
  #allocation1 [shape = 'u32[144,128]{1,0:T(1,128)}', space=vmem, size = 0x12000, scoped, tag = 'internal scratch']
  %s0 = inlined_call_operand.vmem [shape: bf16[16,128], index: 0, kind: input, shape index: {}]
  %s1 = inlined_call_operand.vmem [shape: bf16[16,1], index: 1, kind: input, shape index: {}]
  %s2 = inlined_call_operand.hbm [shape: bf16[128,128], index: 2, kind: input, shape index: {}]
  %s3 = inlined_call_operand.vmem [shape: f32[1,128], index: 3, kind: input, shape index: {}]
  %s4 = inlined_call_operand.vmem [shape: f32[1,128], index: 4, kind: input, shape index: {}]
  %s5 = inlined_call_operand.hbm [shape: bf16[128,128], index: 5, kind: input, shape index: {}]
  %s6 = inlined_call_operand.vmem [shape: f32[1,128], index: 6, kind: input, shape index: {}]
  %s7 = inlined_call_operand.hbm [shape: bf16[128,128], index: 7, kind: input, shape index: {}]
  %s8 = inlined_call_operand.vmem [shape: f32[1,128], index: 8, kind: input, shape index: {}]
  %s9 = inlined_call_operand.hbm [shape: bf16[16,128], index: 9, kind: output, shape index: {}]
  %s10 = sld [smem:[#allocation0]]
  $region58: #{tpu_custom_call.1} parent=0
    _
  %s12 = ssub.s32 1, %s10
  %s13 = scalar_select 0, %s12, %s10
  $region1: #{tpu_custom_call.1} parent=0
    #allocation2 [shape = 'u8[32768]{0}', space=vmem, size = 0x8000, scoped, tag = 'input window, operand 2, single buffered']
    #allocation3 [shape = 's32[1]{0}', space=sflag, size = 0x4, scoped, tag = 'scoped memory for tpu_custom_call.1']
    #allocation4 [shape = 's32[1]{0}', space=sflag, size = 0x4, scoped, tag = 'scoped memory for tpu_custom_call.1']
    #allocation5 [shape = 'u8[32768]{0}', space=vmem, size = 0x8000, scoped, tag = 'input window, operand 5, single buffered']
    #allocation6 [shape = 's32[1]{0}', space=sflag, size = 0x4, scoped, tag = 'scoped memory for tpu_custom_call.1']
    #allocation7 [shape = 'u8[32768]{0}', space=vmem, size = 0x8000, scoped, tag = 'input window, operand 7, single buffered']
    #allocation8 [shape = 'u8[4096]{0}', space=vmem, size = 0x1000, scoped, tag = 'output window, operand 0, single buffered']
    %14 = vsyncpa [#allocation3], 0
    %15 = vsyncpa [#allocation6], 0
    %16 = vsyncpa [#allocation4], 0
    // Predicated region
    $region2: #{tpu_custom_call.1} parent=1 // pred_check
      _
    $region3: #{tpu_custom_call.1} parent=1 // pred_check_branch
      %18 = sbr.rel (0) target = $region5
    $region4: #{tpu_custom_call.1} parent=1 // pred_region
      _
    $region5: #{tpu_custom_call.1} parent=1 // pred_fallthru
      _
    // Predicated region
    $region6: #{tpu_custom_call.1} parent=1 // pred_check
      _
    $region7: #{tpu_custom_call.1} parent=1 // pred_check_branch
      %20 = sbr.rel (0) target = $region9
    $region8: #{tpu_custom_call.1} parent=1 // pred_region
      _
    $region9: #{tpu_custom_call.1} parent=1 // pred_fallthru
      _
    // Predicated region
    $region10: #{tpu_custom_call.1} parent=1 // pred_check
      _
    $region11: #{tpu_custom_call.1} parent=1 // pred_check_branch
      %22 = sbr.rel (0) target = $region13
    $region12: #{tpu_custom_call.1} parent=1 // pred_region
      %s24 = ssub.s32 1024, 1024
      %25 = vsyncadd [#allocation3], %s24
      %s26 = sshll.u32 [#allocation2], 4
      %s27 = int_to_ptr.vmem [resolvable:$true] %s26
      %32 = dma.hbm_to_vmem [thread:$0]  %s2, 1024, %s27, [#allocation3], 64, 64, 4
    $region13: #{tpu_custom_call.1} parent=1 // pred_fallthru
      _
    // Predicated region
    $region14: #{tpu_custom_call.1} parent=1 // pred_check
      _
    $region15: #{tpu_custom_call.1} parent=1 // pred_check_branch
      %34 = sbr.rel (0) target = $region17
    $region16: #{tpu_custom_call.1} parent=1 // pred_region
      _
    $region17: #{tpu_custom_call.1} parent=1 // pred_fallthru
      _
    // Predicated region
    $region18: #{tpu_custom_call.1} parent=1 // pred_check
      _
    $region19: #{tpu_custom_call.1} parent=1 // pred_check_branch
      %36 = sbr.rel (0) target = $region21
    $region20: #{tpu_custom_call.1} parent=1 // pred_region
      _
    $region21: #{tpu_custom_call.1} parent=1 // pred_fallthru
      _
    // Predicated region
    $region22: #{tpu_custom_call.1} parent=1 // pred_check
      _
    $region23: #{tpu_custom_call.1} parent=1 // pred_check_branch
      %38 = sbr.rel (0) target = $region25
    $region24: #{tpu_custom_call.1} parent=1 // pred_region
      %s40 = ssub.s32 1024, 1024
      %41 = vsyncadd [#allocation6], %s40
      %s42 = sshll.u32 [#allocation5], 4
      %s43 = int_to_ptr.vmem [resolvable:$true] %s42
      %48 = dma.hbm_to_vmem [thread:$0]  %s5, 1024, %s43, [#allocation6], 64, 64, 4
    $region25: #{tpu_custom_call.1} parent=1 // pred_fallthru
      _
    // Predicated region
    $region26: #{tpu_custom_call.1} parent=1 // pred_check
      _
    $region27: #{tpu_custom_call.1} parent=1 // pred_check_branch
      %50 = sbr.rel (0) target = $region29
    $region28: #{tpu_custom_call.1} parent=1 // pred_region
      _
    $region29: #{tpu_custom_call.1} parent=1 // pred_fallthru
      _
    // Predicated region
    $region30: #{tpu_custom_call.1} parent=1 // pred_check
      _
    $region31: #{tpu_custom_call.1} parent=1 // pred_check_branch
      %52 = sbr.rel (0) target = $region33
    $region32: #{tpu_custom_call.1} parent=1 // pred_region
      %s54 = ssub.s32 1024, 1024
      %55 = vsyncadd [#allocation6], %s54
      %s56 = sshll.u32 [#allocation7], 4
      %s57 = int_to_ptr.vmem [resolvable:$true] %s56
      %62 = dma.hbm_to_vmem [thread:$0]  %s7, 1024, %s57, [#allocation6], 64, 64, 4
    $region33: #{tpu_custom_call.1} parent=1 // pred_fallthru
      _
    // Predicated region
    $region34: #{tpu_custom_call.1} parent=1 // pred_check
      _
    $region35: #{tpu_custom_call.1} parent=1 // pred_check_branch
      %64 = sbr.rel (0) target = $region37
    $region36: #{tpu_custom_call.1} parent=1 // pred_region
      _
    $region37: #{tpu_custom_call.1} parent=1 // pred_fallthru
      _
    // Predicated region
    $region38: #{tpu_custom_call.1} parent=1 // pred_check
      _
    $region39: #{tpu_custom_call.1} parent=1 // pred_check_branch
      %66 = sbr.rel (0) target = $region41
    $region40: #{tpu_custom_call.1} parent=1 // pred_region
      %67 = dma.done [#allocation3], 1024
    $region41: #{tpu_custom_call.1} parent=1 // pred_fallthru
      _
    // Predicated region
    $region42: #{tpu_custom_call.1} parent=1 // pred_check
      _
    $region43: #{tpu_custom_call.1} parent=1 // pred_check_branch
      %69 = sbr.rel (0) target = $region45
    $region44: #{tpu_custom_call.1} parent=1 // pred_region
      %70 = dma.done [#allocation6], 1024
    $region45: #{tpu_custom_call.1} parent=1 // pred_fallthru
      _
    // Predicated region
    $region46: #{tpu_custom_call.1} parent=1 // pred_check
      _
    $region47: #{tpu_custom_call.1} parent=1 // pred_check_branch
      %72 = sbr.rel (0) target = $region49
    $region48: #{tpu_custom_call.1} parent=1 // pred_region
      %73 = dma.done [#allocation6], 1024
    $region49: #{tpu_custom_call.1} parent=1 // pred_fallthru
      _
    %v75 = vld [vmem:[%s0] sm:$0xf]
    %v76 = vld [vmem:[%s0 + $0x4] sm:$0xf]
    %v77 = vld [vmem:[#allocation2] sm:$0xf]
    %v78 = vld [vmem:[#allocation2 + $0x4] sm:$0xf]
    %v79 = vld [vmem:[#allocation2 + $0x8] sm:$0xf]
    %v80 = vld [vmem:[#allocation2 + $0xc] sm:$0xf]
    %v81 = vld [vmem:[#allocation2 + $0x10] sm:$0xf]
    %v82 = vld [vmem:[#allocation2 + $0x14] sm:$0xf]
    %v83 = vld [vmem:[#allocation2 + $0x18] sm:$0xf]
    %v84 = vld [vmem:[#allocation2 + $0x1c] sm:$0xf]
    %v85 = vld [vmem:[#allocation2 + $0x20] sm:$0xf]
    %v86 = vld [vmem:[#allocation2 + $0x24] sm:$0xf]
    %v87 = vld [vmem:[#allocation2 + $0x28] sm:$0xf]
    %v88 = vld [vmem:[#allocation2 + $0x2c] sm:$0xf]
    %v89 = vld [vmem:[#allocation2 + $0x30] sm:$0xf]
    %v90 = vld [vmem:[#allocation2 + $0x34] sm:$0xf]
    %v91 = vld [vmem:[#allocation2 + $0x38] sm:$0xf]
    %v92 = vld [vmem:[#allocation2 + $0x3c] sm:$0xf]
    %v93 = vld [vmem:[%s1] sm:$0xf]
    %v94 = vld [vmem:[%s1 + $0x4] sm:$0xf]
    %v95 = vunpack.c.l.bf16 %v93
    %v96 = vunpack.c.l.bf16 %v94
    %v97 = vld [vmem:[%s3] sm:$0x1]
    %99 = vset.pattern.permute.xlu0 0
    %100 = vperm.xlu0 %99, %v95
    %v101 = vpop.permute.xlu0 %100
    %104 = vset.pattern.permute.xlu0 0
    %105 = vperm.xlu0 %104, %v96
    %v106 = vpop.permute.xlu0 %105
    %v109 = vlaneseq
    %v110 = vshrl.u32 %v109, 7
    %v111 = vsub.s32 0, %v110
    %v112 = vrot.slane %v97, %v111
    %v114 = vmul.f32 %v101, %v112
    %v115 = vmul.f32 %v106, %v112
    %v118 = vunpack.c.l.b16 %v75
    %v119 = vunpack.c.l.b16 %v76
    %v120 = vpack.c.b16 %v119, %v118
    %v138 = vunpack.c.l.b16 %v77
    %v139 = vunpack.c.l.b16 %v78
    %v140 = vunpack.c.l.b16 %v79
    %v141 = vunpack.c.l.b16 %v80
    %v142 = vunpack.c.l.b16 %v81
    %v143 = vunpack.c.l.b16 %v82
    %v144 = vunpack.c.l.b16 %v83
    %v145 = vunpack.c.l.b16 %v84
    %v146 = vunpack.c.l.b16 %v85
    %v147 = vunpack.c.l.b16 %v86
    %v148 = vunpack.c.l.b16 %v87
    %v149 = vunpack.c.l.b16 %v88
    %v150 = vunpack.c.l.b16 %v89
    %v151 = vunpack.c.l.b16 %v90
    %v152 = vunpack.c.l.b16 %v91
    %v153 = vunpack.c.l.b16 %v92
    %v154 = vpack.c.b16 %v139, %v138
    %v155 = vpack.c.b16 %v141, %v140
    %v156 = vpack.c.b16 %v143, %v142
    %v157 = vpack.c.b16 %v145, %v144
    %v158 = vpack.c.b16 %v147, %v146
    %v159 = vpack.c.b16 %v149, %v148
    %v160 = vpack.c.b16 %v151, %v150
    %v161 = vpack.c.b16 %v153, %v152
    %170 = vmatprep.subr.bf16.mxu0 0
    %171 = vmatpush1.bf16.msra.mxu0 %v161
    %172 = vmatprep.subr.bf16.mxu0 0
    %173 = vmatpush1.bf16.msra.mxu0 %v160
    %174 = vmatprep.subr.bf16.mxu0 0
    %175 = vmatpush1.bf16.msra.mxu0 %v159
    %176 = vmatprep.subr.bf16.mxu0 0
    %177 = vmatpush1.bf16.msra.mxu0 %v158
    %178 = vmatprep.subr.bf16.mxu0 0
    %179 = vmatpush1.bf16.msra.mxu0 %v157
    %180 = vmatprep.subr.bf16.mxu0 0
    %181 = vmatpush1.bf16.msra.mxu0 %v156
    %182 = vmatprep.subr.bf16.mxu0 0
    %183 = vmatpush1.bf16.msra.mxu0 %v155
    %184 = vmatprep.subr.bf16.mxu0 0
    %185 = vmatpush1.bf16.msra.mxu0 %v154
    %186 = vmatprep.subr.bf16.mxu0 0
    %187 = vmatpush2.bf16.msra.mxu0 0
    %188 = vmatprep.subr.bf16.mxu0 0
    %189 = vmatpush2.bf16.msra.mxu0 0
    %190 = vmatprep.subr.bf16.mxu0 0
    %191 = vmatpush2.bf16.msra.mxu0 0
    %192 = vmatprep.subr.bf16.mxu0 0
    %193 = vmatpush2.bf16.msra.mxu0 0
    %194 = vmatprep.subr.bf16.mxu0 0
    %195 = vmatpush2.bf16.msra.mxu0 0
    %196 = vmatprep.subr.bf16.mxu0 0
    %197 = vmatpush2.bf16.msra.mxu0 0
    %198 = vmatprep.subr.bf16.mxu0 0
    %199 = vmatpush2.bf16.msra.mxu0 0
    %200 = vmatprep.subr.bf16.mxu0 0
    %201 = vmatpush2.bf16.msra.mxu0 0
    %202 = vmatprep.mubr.bf16.mxu0 0
    %203 = vmatmul.mubr.bf16.gmra.mxu0 %v120
    %v204 = vpop.f32.mrf.mxu0
    %v205 = vadd.f32 %v114, %v204
    %v206 = vpop.f32.mrf.mxu0
    %v207 = vpop.f32.mrf.mxu0
    %v208 = vadd.f32 %v115, %v207
    %v209 = vpop.f32.mrf.mxu0
    %210 = vdwg.mxu0
    %v211 = vld [vmem:[%s4] sm:$0x1]
    %v213 = vlaneseq
    %v214 = vshrl.u32 %v213, 7
    %v215 = vsub.s32 0, %v214
    %v216 = vrot.slane %v211, %v215
    %v218 = vadd.f32 %v205, %v216
    %v219 = vadd.f32 %v208, %v216
    %v220 = vmax.f32 %v218, 0.0
    %v221 = vmax.f32 %v219, 0.0
    %v222 = vpack.c.bf16 %v221, %v220
    %v223 = vld [vmem:[#allocation5] sm:$0xf]
    %v224 = vld [vmem:[#allocation5 + $0x4] sm:$0xf]
    %v225 = vld [vmem:[#allocation5 + $0x8] sm:$0xf]
    %v226 = vld [vmem:[#allocation5 + $0xc] sm:$0xf]
    %v227 = vld [vmem:[#allocation5 + $0x10] sm:$0xf]
    %v228 = vld [vmem:[#allocation5 + $0x14] sm:$0xf]
    %v229 = vld [vmem:[#allocation5 + $0x18] sm:$0xf]
    %v230 = vld [vmem:[#allocation5 + $0x1c] sm:$0xf]
    %v231 = vld [vmem:[#allocation5 + $0x20] sm:$0xf]
    %v232 = vld [vmem:[#allocation5 + $0x24] sm:$0xf]
    %v233 = vld [vmem:[#allocation5 + $0x28] sm:$0xf]
    %v234 = vld [vmem:[#allocation5 + $0x2c] sm:$0xf]
    %v235 = vld [vmem:[#allocation5 + $0x30] sm:$0xf]
    %v236 = vld [vmem:[#allocation5 + $0x34] sm:$0xf]
    %v237 = vld [vmem:[#allocation5 + $0x38] sm:$0xf]
    %v238 = vld [vmem:[#allocation5 + $0x3c] sm:$0xf]
    %v239 = vld [vmem:[%s6] sm:$0x1]
    %v241 = vlaneseq
    %v242 = vshrl.u32 %v241, 7
    %v243 = vsub.s32 0, %v242
    %v244 = vrot.slane %v239, %v243
    %v262 = vunpack.c.l.b16 %v223
    %v263 = vunpack.c.l.b16 %v224
    %v264 = vunpack.c.l.b16 %v225
    %v265 = vunpack.c.l.b16 %v226
    %v266 = vunpack.c.l.b16 %v227
    %v267 = vunpack.c.l.b16 %v228
    %v268 = vunpack.c.l.b16 %v229
    %v269 = vunpack.c.l.b16 %v230
    %v270 = vunpack.c.l.b16 %v231
    %v271 = vunpack.c.l.b16 %v232
    %v272 = vunpack.c.l.b16 %v233
    %v273 = vunpack.c.l.b16 %v234
    %v274 = vunpack.c.l.b16 %v235
    %v275 = vunpack.c.l.b16 %v236
    %v276 = vunpack.c.l.b16 %v237
    %v277 = vunpack.c.l.b16 %v238
    %v278 = vpack.c.b16 %v263, %v262
    %v279 = vpack.c.b16 %v265, %v264
    %v280 = vpack.c.b16 %v267, %v266
    %v281 = vpack.c.b16 %v269, %v268
    %v282 = vpack.c.b16 %v271, %v270
    %v283 = vpack.c.b16 %v273, %v272
    %v284 = vpack.c.b16 %v275, %v274
    %v285 = vpack.c.b16 %v277, %v276
    %294 = vmatprep.subr.bf16.mxu0 0
    %295 = vmatpush1.bf16.msra.mxu0 %v285
    %296 = vmatprep.subr.bf16.mxu0 0
    %297 = vmatpush1.bf16.msra.mxu0 %v284
    %298 = vmatprep.subr.bf16.mxu0 0
    %299 = vmatpush1.bf16.msra.mxu0 %v283
    %300 = vmatprep.subr.bf16.mxu0 0
    %301 = vmatpush1.bf16.msra.mxu0 %v282
    %302 = vmatprep.subr.bf16.mxu0 0
    %303 = vmatpush1.bf16.msra.mxu0 %v281
    %304 = vmatprep.subr.bf16.mxu0 0
    %305 = vmatpush1.bf16.msra.mxu0 %v280
    %306 = vmatprep.subr.bf16.mxu0 0
    %307 = vmatpush1.bf16.msra.mxu0 %v279
    %308 = vmatprep.subr.bf16.mxu0 0
    %309 = vmatpush1.bf16.msra.mxu0 %v278
    %310 = vmatprep.subr.bf16.mxu0 0
    %311 = vmatpush2.bf16.msra.mxu0 0
    %312 = vmatprep.subr.bf16.mxu0 0
    %313 = vmatpush2.bf16.msra.mxu0 0
    %314 = vmatprep.subr.bf16.mxu0 0
    %315 = vmatpush2.bf16.msra.mxu0 0
    %316 = vmatprep.subr.bf16.mxu0 0
    %317 = vmatpush2.bf16.msra.mxu0 0
    %318 = vmatprep.subr.bf16.mxu0 0
    %319 = vmatpush2.bf16.msra.mxu0 0
    %320 = vmatprep.subr.bf16.mxu0 0
    %321 = vmatpush2.bf16.msra.mxu0 0
    %322 = vmatprep.subr.bf16.mxu0 0
    %323 = vmatpush2.bf16.msra.mxu0 0
    %324 = vmatprep.subr.bf16.mxu0 0
    %325 = vmatpush2.bf16.msra.mxu0 0
    %326 = vmatprep.mubr.bf16.mxu0 0
    %327 = vmatmul.mubr.bf16.gmra.mxu0 %v222
    %v328 = vpop.f32.mrf.mxu0
    %v329 = vadd.f32 %v244, %v328
    %v330 = vpop.f32.mrf.mxu0
    %v331 = vpop.f32.mrf.mxu0
    %v332 = vadd.f32 %v244, %v331
    %v333 = vpop.f32.mrf.mxu0
    %334 = vdwg.mxu0
    %v335 = vmax.f32 %v329, 0.0
    %v336 = vmax.f32 %v332, 0.0
    %v337 = vpack.c.bf16 %v336, %v335
    %v338 = vld [vmem:[#allocation7] sm:$0xf]
    %v339 = vld [vmem:[#allocation7 + $0x4] sm:$0xf]
    %v340 = vld [vmem:[#allocation7 + $0x8] sm:$0xf]
    %v341 = vld [vmem:[#allocation7 + $0xc] sm:$0xf]
    %v342 = vld [vmem:[#allocation7 + $0x10] sm:$0xf]
    %v343 = vld [vmem:[#allocation7 + $0x14] sm:$0xf]
    %v344 = vld [vmem:[#allocation7 + $0x18] sm:$0xf]
    %v345 = vld [vmem:[#allocation7 + $0x1c] sm:$0xf]
    %v346 = vld [vmem:[#allocation7 + $0x20] sm:$0xf]
    %v347 = vld [vmem:[#allocation7 + $0x24] sm:$0xf]
    %v348 = vld [vmem:[#allocation7 + $0x28] sm:$0xf]
    %v349 = vld [vmem:[#allocation7 + $0x2c] sm:$0xf]
    %v350 = vld [vmem:[#allocation7 + $0x30] sm:$0xf]
    %v351 = vld [vmem:[#allocation7 + $0x34] sm:$0xf]
    %v352 = vld [vmem:[#allocation7 + $0x38] sm:$0xf]
    %v353 = vld [vmem:[#allocation7 + $0x3c] sm:$0xf]
    %v354 = vld [vmem:[%s8] sm:$0x1]
    %v356 = vlaneseq
    %v357 = vshrl.u32 %v356, 7
    %v358 = vsub.s32 0, %v357
    %v359 = vrot.slane %v354, %v358
    %v377 = vunpack.c.l.b16 %v338
    %v378 = vunpack.c.l.b16 %v339
    %v379 = vunpack.c.l.b16 %v340
    %v380 = vunpack.c.l.b16 %v341
    %v381 = vunpack.c.l.b16 %v342
    %v382 = vunpack.c.l.b16 %v343
    %v383 = vunpack.c.l.b16 %v344
    %v384 = vunpack.c.l.b16 %v345
    %v385 = vunpack.c.l.b16 %v346
    %v386 = vunpack.c.l.b16 %v347
    %v387 = vunpack.c.l.b16 %v348
    %v388 = vunpack.c.l.b16 %v349
    %v389 = vunpack.c.l.b16 %v350
    %v390 = vunpack.c.l.b16 %v351
    %v391 = vunpack.c.l.b16 %v352
    %v392 = vunpack.c.l.b16 %v353
    %v393 = vpack.c.b16 %v378, %v377
    %v394 = vpack.c.b16 %v380, %v379
    %v395 = vpack.c.b16 %v382, %v381
    %v396 = vpack.c.b16 %v384, %v383
    %v397 = vpack.c.b16 %v386, %v385
    %v398 = vpack.c.b16 %v388, %v387
    %v399 = vpack.c.b16 %v390, %v389
    %v400 = vpack.c.b16 %v392, %v391
    %409 = vmatprep.subr.bf16.mxu0 0
    %410 = vmatpush1.bf16.msra.mxu0 %v400
    %411 = vmatprep.subr.bf16.mxu0 0
    %412 = vmatpush1.bf16.msra.mxu0 %v399
    %413 = vmatprep.subr.bf16.mxu0 0
    %414 = vmatpush1.bf16.msra.mxu0 %v398
    %415 = vmatprep.subr.bf16.mxu0 0
    %416 = vmatpush1.bf16.msra.mxu0 %v397
    %417 = vmatprep.subr.bf16.mxu0 0
    %418 = vmatpush1.bf16.msra.mxu0 %v396
    %419 = vmatprep.subr.bf16.mxu0 0
    %420 = vmatpush1.bf16.msra.mxu0 %v395
    %421 = vmatprep.subr.bf16.mxu0 0
    %422 = vmatpush1.bf16.msra.mxu0 %v394
    %423 = vmatprep.subr.bf16.mxu0 0
    %424 = vmatpush1.bf16.msra.mxu0 %v393
    %425 = vmatprep.subr.bf16.mxu0 0
    %426 = vmatpush2.bf16.msra.mxu0 0
    %427 = vmatprep.subr.bf16.mxu0 0
    %428 = vmatpush2.bf16.msra.mxu0 0
    %429 = vmatprep.subr.bf16.mxu0 0
    %430 = vmatpush2.bf16.msra.mxu0 0
    %431 = vmatprep.subr.bf16.mxu0 0
    %432 = vmatpush2.bf16.msra.mxu0 0
    %433 = vmatprep.subr.bf16.mxu0 0
    %434 = vmatpush2.bf16.msra.mxu0 0
    %435 = vmatprep.subr.bf16.mxu0 0
    %436 = vmatpush2.bf16.msra.mxu0 0
    %437 = vmatprep.subr.bf16.mxu0 0
    %438 = vmatpush2.bf16.msra.mxu0 0
    %439 = vmatprep.subr.bf16.mxu0 0
    %440 = vmatpush2.bf16.msra.mxu0 0
    %441 = vmatprep.mubr.bf16.mxu0 0
    %442 = vmatmul.mubr.bf16.gmra.mxu0 %v337
    %v443 = vpop.f32.mrf.mxu0
    %v444 = vadd.f32 %v359, %v443
    %v445 = vpop.f32.mrf.mxu0
    %v446 = vpop.f32.mrf.mxu0
    %v447 = vadd.f32 %v359, %v446
    %v448 = vpop.f32.mrf.mxu0
    %449 = vdwg.mxu0
    %450 = vmax.xlane.f32.xlu0 %v444
    %v451 = vpop.xlane.xlu0 %450
    %452 = vmax.xlane.f32.xlu0 %v447
    %v453 = vpop.xlane.xlu0 %452
    %v454 = vsub.f32 %v444, %v451
    %v455 = vsub.f32 %v447, %v453
    %v456 = vmul.f32 %v454, 1.442695
    %v457 = vpow.pop %v456
    %v458 = vmul.f32 %v455, 1.442695
    %v459 = vpow.pop %v458
    %460 = vadd.xlane.f32.xlu0 %v457
    %v461 = vpop.xlane.xlu0 %460
    %462 = vadd.xlane.f32.xlu0 %v459
    %v463 = vpop.xlane.xlu0 %462
    %v464 = vrcp.pop %v461
    %v465 = vmul.f32 %v457, %v464
    %v466 = vrcp.pop %v463
    %v467 = vmul.f32 %v459, %v466
    %v468 = vpack.c.bf16 %v467, %v465
    %v470 = vunpack.c.l.b16 %v468
    %v471 = vunpack.c.h.b16 %v468
    %v472 = vpack.c.b16 %v470, %v470
    %v473 = vpack.c.b16 %v471, %v471
    %476 = vst [vmem:[#allocation8] sm:$0xf] %v472
    %477 = vst [vmem:[#allocation8 + $0x4] sm:$0xf] %v473
    // Predicated region
    $region50: #{tpu_custom_call.1} parent=1 // pred_check
      _
    $region51: #{tpu_custom_call.1} parent=1 // pred_check_branch
      %479 = sbr.rel (0) target = $region53
    $region52: #{tpu_custom_call.1} parent=1 // pred_region
      %s481 = ssub.s32 128, 128
      %482 = vsyncadd [#allocation4], %s481
      %s483 = sshll.u32 [#allocation8], 4
      %s484 = int_to_ptr.vmem [resolvable:$true] %s483
      %489 = dma.vmem_to_hbm [thread:$0]  %s484, 128, %s9, [#allocation4], 64, 64, 4
    $region53: #{tpu_custom_call.1} parent=1 // pred_fallthru
      _
    // Predicated region
    $region54: #{tpu_custom_call.1} parent=1 // pred_check
      _
    $region55: #{tpu_custom_call.1} parent=1 // pred_check_branch
      %491 = sbr.rel (0) target = $region57
    $region56: #{tpu_custom_call.1} parent=1 // pred_region
      %492 = dma.done [#allocation4], 128
    $region57: #{tpu_custom_call.1} parent=1 // pred_fallthru
      _
    %493 = vsyncpa [#allocation3], 1
    %494 = vsyncpa [#allocation6], 1
    %495 = vsyncpa [#allocation4], 1

</llo_original>
